<compile_context>
chip_gen: v7x
topology: tpu7x:2x2x1
jax: 0.10.0
libtpu: 0.0.40
codegen_flags: <defaults>
</compile_context>

<pallas_src>
import functools

import jax
import jax.numpy as jnp
from jax.experimental import pallas as pl
from jax.experimental.pallas import tpu as pltpu

H1 = 128        # fc1 width (already lane-aligned)
H2 = 64         # fc2 logical width
H2P = 128       # fc2 padded width (lane-dense)
MAX_TB = 2048   # max batch tile: x+out double buffers ~2 MiB, safe on v7x (64 MiB VMEM)
K_ALIGN = 16    # bf16 sublane pack for the contraction / batch axes


def dqn_kernel(x_ref, w1_ref, b1_ref, w2_ref, b2_ref, w3_ref, b3_ref, o_ref):
    # Three MXU matmuls (bf16 operands, f32 accumulate) + f32 bias/ReLU on VPU.
    h1 = jnp.dot(x_ref[...], w1_ref[...],
                 preferred_element_type=jnp.float32) + b1_ref[...]
    h1 = jnp.maximum(h1, 0.0)
    h2 = jnp.dot(h1.astype(jnp.bfloat16), w2_ref[...],
                 preferred_element_type=jnp.float32) + b2_ref[...]
    h2 = jnp.maximum(h2, 0.0)
    out = jnp.dot(h2.astype(jnp.bfloat16), w3_ref[...],
                  preferred_element_type=jnp.float32) + b3_ref[...]
    o_ref[...] = out.astype(o_ref.dtype)


def _round_up(x, m):
    return (x + m - 1) // m * m


def _num_tensorcores():
    """Best-effort TensorCores-per-device query (v7x/v4/v5p = 2, else 1)."""
    try:
        d = jax.devices()[0]
        nc = getattr(d, "num_cores", None)
        if nc:
            return max(1, int(nc))
        kind = str(getattr(d, "device_kind", "")).lower()
        if ("v7" in kind) or ("v4" in kind) or ("v5p" in kind):
            return 2
    except Exception:
        pass
    return 1


def prepare_params(params, input_dim, output_dim):
    """One-time padding + bf16 cast of the weights (done outside the hot path).

    Zero-padding is semantics-preserving: extra input columns hit zero weight
    rows, padded h2 lanes are ReLU(0 + 0) = 0 and hit zero w3 rows, padded
    output lanes are sliced off in the wrapper.
    """
    w1, b1, w2, b2, w3, b3 = params
    dp_in = _round_up(input_dim, K_ALIGN)       # 9 -> 16, not 128
    dp_out = _round_up(output_dim, 128)

    w1_p = jnp.zeros((dp_in, H1), jnp.bfloat16).at[:input_dim, :].set(
        w1.astype(jnp.bfloat16))
    b1_p = b1.reshape(1, H1).astype(jnp.float32)

    w2_p = jnp.zeros((H1, H2P), jnp.bfloat16).at[:, :H2].set(
        w2.astype(jnp.bfloat16))
    b2_p = jnp.zeros((1, H2P), jnp.float32).at[:, :H2].set(b2.reshape(1, H2))

    w3_p = jnp.zeros((H2P, dp_out), jnp.bfloat16).at[:H2, :output_dim].set(
        w3.astype(jnp.bfloat16))
    b3_p = jnp.zeros((1, dp_out), jnp.float32).at[:, :output_dim].set(
        b3.reshape(1, -1))

    return (w1_p, b1_p, w2_p, b2_p, w3_p, b3_p)


@functools.partial(jax.jit, static_argnames=("output_dim", "out_dtype"))
def dqn_forward(x, padded_params, *, output_dim, out_dtype=jnp.float32):
    """x: (B, input_dim) float32. padded_params from prepare_params().
    Returns (B, output_dim) in out_dtype (default float32)."""
    w1_p, b1_p, w2_p, b2_p, w3_p, b3_p = padded_params
    B, input_dim = x.shape
    dp_in = w1_p.shape[0]
    dp_out = w3_p.shape[1]

    # --- Tiling policy (all trace-time Python ints) -------------------------
    b_al = _round_up(max(B, K_ALIGN), K_ALIGN)
    nsteps = pl.cdiv(b_al, MAX_TB)              # one big tile on single-TC chips
    ntc = _num_tensorcores()
    if ntc > 1:
        # Ensure the grid has >= num_cores steps (when there's enough work) so
        # "parallel" semantics actually shards the batch across TensorCores.
        nsteps = max(nsteps, min(ntc, b_al // K_ALIGN))
    tb = _round_up(pl.cdiv(b_al, nsteps), K_ALIGN)
    bp = nsteps * tb                             # padding bounded to < one tile

    # Single fused pad+cast for x (the only per-call tensor prep); weights are
    # pre-padded once in prepare_params.
    x_p = jnp.pad(x.astype(jnp.bfloat16),
                  ((0, bp - B), (0, dp_in - input_dim)))

    def const(shape):
        # Weights/biases: same block every step -> fetched once, VMEM-resident.
        return pl.BlockSpec(shape, lambda i: (0, 0))

    out_p = pl.pallas_call(
        dqn_kernel,
        out_shape=jax.ShapeDtypeStruct((bp, dp_out), out_dtype),
        grid=(nsteps,),
        in_specs=[
            pl.BlockSpec((tb, dp_in), lambda i: (i, 0)),   # x: tiled over batch
            const((dp_in, H1)),
            const((1, H1)),
            const((H1, H2P)),
            const((1, H2P)),
            const((H2P, dp_out)),
            const((1, dp_out)),
        ],
        out_specs=pl.BlockSpec((tb, dp_out), lambda i: (i, 0)),
        compiler_params=pltpu.CompilerParams(
            dimension_semantics=("parallel",)),   # batch split across TCs (v7x)
    )(x_p, w1_p, b1_p, w2_p, b2_p, w3_p, b3_p)

    # Callers needing a lane-dense padded slab could consume out_p directly;
    # slice here to match the PyTorch module's (B, output_dim) contract.
    return out_p[:B, :output_dim]


def init_params(key, input_dim, output_dim):
    """Deterministic PyTorch-Linear-style init: U(-1/sqrt(fan_in), 1/sqrt(fan_in))."""
    ks = jax.random.split(key, 6)

    def lin(kw, kb, fan_in, fan_out):
        bound = 1.0 / jnp.sqrt(fan_in)
        w = jax.random.uniform(kw, (fan_in, fan_out), jnp.float32, -bound, bound)
        b = jax.random.uniform(kb, (fan_out,), jnp.float32, -bound, bound)
        return w, b

    w1, b1 = lin(ks[0], ks[1], input_dim, H1)
    w2, b2 = lin(ks[2], ks[3], H1, H2)
    w3, b3 = lin(ks[4], ks[5], H2, output_dim)
    return (w1, b1, w2, b2, w3, b3)


def reference_forward(x, params):
    """Pure-JAX reference with the same bf16-operand / f32-accumulate math."""
    w1, b1, w2, b2, w3, b3 = params
    bf = jnp.bfloat16
    h1 = jnp.maximum(
        jnp.dot(x.astype(bf), w1.astype(bf), preferred_element_type=jnp.float32) + b1, 0.0)
    h2 = jnp.maximum(
        jnp.dot(h1.astype(bf), w2.astype(bf), preferred_element_type=jnp.float32) + b2, 0.0)
    return jnp.dot(h2.astype(bf), w3.astype(bf), preferred_element_type=jnp.float32) + b3


if __name__ == "__main__":
    # Tic-tac-toe board: 9 cells in, 9 Q-values out.
    input_dim, output_dim, batch = 9, 9, 2

    key = jax.random.PRNGKey(0)
    k_params, k_x, k_x2 = jax.random.split(key, 3)
    params = init_params(k_params, input_dim, output_dim)
    padded = prepare_params(params, input_dim, output_dim)

    # Small inference-style batch (grid = 1).
    x = jax.random.uniform(k_x, (batch, input_dim), jnp.float32, -1.0, 1.0)
    out = jax.block_until_ready(dqn_forward(x, padded, output_dim=output_dim))
    ref = reference_forward(x, params)
    assert out.shape == (batch, output_dim)
    assert out.dtype == jnp.float32
    assert jnp.allclose(out, ref, atol=1e-2, rtol=1e-2), "mismatch vs reference (small batch)"

    # Replay-buffer-style batch (exercises the batch tiling path).
    x2 = jax.random.uniform(k_x2, (1024, input_dim), jnp.float32, -1.0, 1.0)
    out2 = jax.block_until_ready(dqn_forward(x2, padded, output_dim=output_dim))
    ref2 = reference_forward(x2, params)
    assert out2.shape == (1024, output_dim)
    assert jnp.allclose(out2, ref2, atol=1e-2, rtol=1e-2), "mismatch vs reference (large batch)"

    # Non-tile-aligned batch: checks the bounded-padding tiling policy.
    x3 = jax.random.uniform(k_x2, (520, input_dim), jnp.float32, -1.0, 1.0)
    out3 = jax.block_until_ready(dqn_forward(x3, padded, output_dim=output_dim))
    ref3 = reference_forward(x3, params)
    assert out3.shape == (520, output_dim)
    assert jnp.allclose(out3, ref3, atol=1e-2, rtol=1e-2), "mismatch vs reference (ragged batch)"

    print("KERNEL_OK")
</pallas_src>

<mosaic_0001>
module attributes {stable_mosaic.version = 11 : i64} {
  func.func @dqn_kernel(%arg0: i32, %arg1: memref<16x16xbf16, #tpu.memory_space<vmem>>, %arg2: memref<16x128xbf16, #tpu.memory_space<vmem>>, %arg3: memref<1x128xf32, #tpu.memory_space<vmem>>, %arg4: memref<128x128xbf16, #tpu.memory_space<vmem>>, %arg5: memref<1x128xf32, #tpu.memory_space<vmem>>, %arg6: memref<128x128xbf16, #tpu.memory_space<vmem>>, %arg7: memref<1x128xf32, #tpu.memory_space<vmem>>, %arg8: memref<16x128xf32, #tpu.memory_space<vmem>>) attributes {dimension_semantics = [#tpu.dimension_semantics<parallel>], iteration_bounds = array<i64: 1>, scalar_prefetch = 0 : i64, scratch_operands = 0 : i64, tpu.core_type = #tpu.core_type<tc>, window_params = [{transform_indices = @transform_0, window_bounds = array<i64: 16, 16>}, {pipeline_mode = #tpu.pipeline_mode<synchronous>, transform_indices = @transform_1, window_bounds = array<i64: 16, 128>}, {pipeline_mode = #tpu.pipeline_mode<synchronous>, transform_indices = @transform_2, window_bounds = array<i64: 1, 128>}, {pipeline_mode = #tpu.pipeline_mode<synchronous>, transform_indices = @transform_3, window_bounds = array<i64: 128, 128>}, {pipeline_mode = #tpu.pipeline_mode<synchronous>, transform_indices = @transform_4, window_bounds = array<i64: 1, 128>}, {pipeline_mode = #tpu.pipeline_mode<synchronous>, transform_indices = @transform_5, window_bounds = array<i64: 128, 128>}, {pipeline_mode = #tpu.pipeline_mode<synchronous>, transform_indices = @transform_6, window_bounds = array<i64: 1, 128>}, {transform_indices = @transform_7, window_bounds = array<i64: 16, 128>}]} {
    %c0 = arith.constant 0 : index
    %c0_0 = arith.constant 0 : index
    %0 = vector.load %arg1[%c0, %c0_0] : memref<16x16xbf16, #tpu.memory_space<vmem>>, vector<16x16xbf16>
    %c0_1 = arith.constant 0 : index
    %c0_2 = arith.constant 0 : index
    %1 = vector.load %arg2[%c0_1, %c0_2] : memref<16x128xbf16, #tpu.memory_space<vmem>>, vector<16x128xbf16>
    %cst = arith.constant dense<0.000000e+00> : vector<16x128xf32>
    %2 = tpu.matmul %0, %1, %cst {dimension_numbers = #tpu.dot_dimension_numbers<[1], [0], [0], [1], [0, 0, 1, 1], [], []>} : vector<16x16xbf16>, vector<16x128xbf16>, vector<16x128xf32> -> vector<16x128xf32>
    %c0_3 = arith.constant 0 : index
    %c0_4 = arith.constant 0 : index
    %3 = vector.load %arg3[%c0_3, %c0_4] : memref<1x128xf32, #tpu.memory_space<vmem>>, vector<1x128xf32>
    %4 = vector.broadcast %3 : vector<1x128xf32> to vector<16x128xf32>
    %5 = arith.addf %2, %4 : vector<16x128xf32>
    %cst_5 = arith.constant 0.000000e+00 : f32
    %6 = vector.broadcast %cst_5 : f32 to vector<16x128xf32>
    %7 = arith.maximumf %5, %6 : vector<16x128xf32>
    %8 = arith.truncf %7 : vector<16x128xf32> to vector<16x128xbf16>
    %c0_6 = arith.constant 0 : index
    %c0_7 = arith.constant 0 : index
    %9 = vector.load %arg4[%c0_6, %c0_7] : memref<128x128xbf16, #tpu.memory_space<vmem>>, vector<128x128xbf16>
    %cst_8 = arith.constant dense<0.000000e+00> : vector<16x128xf32>
    %10 = tpu.matmul %8, %9, %cst_8 {dimension_numbers = #tpu.dot_dimension_numbers<[1], [0], [0], [1], [0, 0, 1, 1], [], []>} : vector<16x128xbf16>, vector<128x128xbf16>, vector<16x128xf32> -> vector<16x128xf32>
    %c0_9 = arith.constant 0 : index
    %c0_10 = arith.constant 0 : index
    %11 = vector.load %arg5[%c0_9, %c0_10] : memref<1x128xf32, #tpu.memory_space<vmem>>, vector<1x128xf32>
    %12 = vector.broadcast %11 : vector<1x128xf32> to vector<16x128xf32>
    %13 = arith.addf %10, %12 : vector<16x128xf32>
    %cst_11 = arith.constant 0.000000e+00 : f32
    %14 = vector.broadcast %cst_11 : f32 to vector<16x128xf32>
    %15 = arith.maximumf %13, %14 : vector<16x128xf32>
    %16 = arith.truncf %15 : vector<16x128xf32> to vector<16x128xbf16>
    %c0_12 = arith.constant 0 : index
    %c0_13 = arith.constant 0 : index
    %17 = vector.load %arg6[%c0_12, %c0_13] : memref<128x128xbf16, #tpu.memory_space<vmem>>, vector<128x128xbf16>
    %cst_14 = arith.constant dense<0.000000e+00> : vector<16x128xf32>
    %18 = tpu.matmul %16, %17, %cst_14 {dimension_numbers = #tpu.dot_dimension_numbers<[1], [0], [0], [1], [0, 0, 1, 1], [], []>} : vector<16x128xbf16>, vector<128x128xbf16>, vector<16x128xf32> -> vector<16x128xf32>
    %c0_15 = arith.constant 0 : index
    %c0_16 = arith.constant 0 : index
    %19 = vector.load %arg7[%c0_15, %c0_16] : memref<1x128xf32, #tpu.memory_space<vmem>>, vector<1x128xf32>
    %20 = vector.broadcast %19 : vector<1x128xf32> to vector<16x128xf32>
    %21 = arith.addf %18, %20 : vector<16x128xf32>
    %c0_17 = arith.constant 0 : index
    %c0_18 = arith.constant 0 : index
    %22 = vector.load %arg8[%c0_17, %c0_18] : memref<16x128xf32, #tpu.memory_space<vmem>>, vector<16x128xf32>
    tpu.vector_store %arg8[%c0_17, %c0_18], %21 {strides = array<i32>} : memref<16x128xf32, #tpu.memory_space<vmem>>, vector<16x128xf32>,
    return
  }
  func.func @transform_0(%arg0: i32) -> (i32, i32) {
    %c0_i32 = arith.constant 0 : i32
    %c0_i32_0 = arith.constant 0 : i32
    return %arg0, %c0_i32 : i32, i32
  }
  func.func @transform_1(%arg0: i32) -> (i32, i32) {
    %c0_i32 = arith.constant 0 : i32
    %c0_i32_0 = arith.constant 0 : i32
    %c0_i32_1 = arith.constant 0 : i32
    return %c0_i32, %c0_i32_0 : i32, i32
  }
  func.func @transform_2(%arg0: i32) -> (i32, i32) {
    %c0_i32 = arith.constant 0 : i32
    %c0_i32_0 = arith.constant 0 : i32
    %c0_i32_1 = arith.constant 0 : i32
    return %c0_i32, %c0_i32_0 : i32, i32
  }
  func.func @transform_3(%arg0: i32) -> (i32, i32) {
    %c0_i32 = arith.constant 0 : i32
    %c0_i32_0 = arith.constant 0 : i32
    %c0_i32_1 = arith.constant 0 : i32
    return %c0_i32, %c0_i32_0 : i32, i32
  }
  func.func @transform_4(%arg0: i32) -> (i32, i32) {
    %c0_i32 = arith.constant 0 : i32
    %c0_i32_0 = arith.constant 0 : i32
    %c0_i32_1 = arith.constant 0 : i32
    return %c0_i32, %c0_i32_0 : i32, i32
  }
  func.func @transform_5(%arg0: i32) -> (i32, i32) {
    %c0_i32 = arith.constant 0 : i32
    %c0_i32_0 = arith.constant 0 : i32
    %c0_i32_1 = arith.constant 0 : i32
    return %c0_i32, %c0_i32_0 : i32, i32
  }
  func.func @transform_6(%arg0: i32) -> (i32, i32) {
    %c0_i32 = arith.constant 0 : i32
    %c0_i32_0 = arith.constant 0 : i32
    %c0_i32_1 = arith.constant 0 : i32
    return %c0_i32, %c0_i32_0 : i32, i32
  }
  func.func @transform_7(%arg0: i32) -> (i32, i32) {
    %c0_i32 = arith.constant 0 : i32
    %c0_i32_0 = arith.constant 0 : i32
    return %arg0, %c0_i32 : i32, i32
  }
}

</mosaic_0001>

<llo_original>
// kernel: dqn_forward.1
$region0: #{dqn_forward.1}
  #allocation0 [shape = 'u32[]', space=smem, size = 0x4, offset = 0x4, fixed_abs, tag = 'smem constant byte address 0x4 - core index']
  #allocation1 [shape = 'u32[144,128]{1,0:T(1,128)}', space=vmem, size = 0x12000, scoped, tag = 'internal scratch']
  %s0 = inlined_call_operand.vmem [shape: bf16[16,16], index: 0, kind: input, shape index: {}]
  %s1 = inlined_call_operand.vmem [shape: bf16[16,128], index: 1, kind: input, shape index: {}]
  %s2 = inlined_call_operand.vmem [shape: f32[1,128], index: 2, kind: input, shape index: {}]
  %s3 = inlined_call_operand.hbm [shape: bf16[128,128], index: 3, kind: input, shape index: {}]
  %s4 = inlined_call_operand.vmem [shape: f32[1,128], index: 4, kind: input, shape index: {}]
  %s5 = inlined_call_operand.hbm [shape: bf16[128,128], index: 5, kind: input, shape index: {}]
  %s6 = inlined_call_operand.vmem [shape: f32[1,128], index: 6, kind: input, shape index: {}]
  %s7 = inlined_call_operand.vmem [shape: f32[16,128], index: 7, kind: output, shape index: {}]
  %s8 = sld [smem:[#allocation0]]
  $region46: #{dqn_forward.1} parent=0
    _
  %s10 = ssub.s32 1, %s8
  %s11 = scalar_select 0, %s10, %s8
  $region1: #{dqn_forward.1} parent=0
    #allocation2 [shape = 'u8[32768]{0}', space=vmem, size = 0x8000, scoped, tag = 'input window, operand 3, single buffered']
    #allocation3 [shape = 's32[1]{0}', space=sflag, size = 0x4, scoped, tag = 'scoped memory for dqn_forward.1']
    #allocation4 [shape = 'u8[32768]{0}', space=vmem, size = 0x8000, scoped, tag = 'input window, operand 5, single buffered']
    #allocation5 [shape = 's32[1]{0}', space=sflag, size = 0x4, scoped, tag = 'scoped memory for dqn_forward.1']
    %12 = vsyncpa [#allocation3], 0
    %13 = vsyncpa [#allocation5], 0
    // Predicated region
    $region2: #{dqn_forward.1} parent=1 // pred_check
      _
    $region3: #{dqn_forward.1} parent=1 // pred_check_branch
      %15 = sbr.rel (0) target = $region5
    $region4: #{dqn_forward.1} parent=1 // pred_region
      _
    $region5: #{dqn_forward.1} parent=1 // pred_fallthru
      _
    // Predicated region
    $region6: #{dqn_forward.1} parent=1 // pred_check
      _
    $region7: #{dqn_forward.1} parent=1 // pred_check_branch
      %17 = sbr.rel (0) target = $region9
    $region8: #{dqn_forward.1} parent=1 // pred_region
      _
    $region9: #{dqn_forward.1} parent=1 // pred_fallthru
      _
    // Predicated region
    $region10: #{dqn_forward.1} parent=1 // pred_check
      _
    $region11: #{dqn_forward.1} parent=1 // pred_check_branch
      %19 = sbr.rel (0) target = $region13
    $region12: #{dqn_forward.1} parent=1 // pred_region
      _
    $region13: #{dqn_forward.1} parent=1 // pred_fallthru
      _
    // Predicated region
    $region14: #{dqn_forward.1} parent=1 // pred_check
      _
    $region15: #{dqn_forward.1} parent=1 // pred_check_branch
      %21 = sbr.rel (0) target = $region17
    $region16: #{dqn_forward.1} parent=1 // pred_region
      %s23 = ssub.s32 1024, 1024
      %24 = vsyncadd [#allocation3], %s23
      %s25 = sshll.u32 [#allocation2], 4
      %s26 = int_to_ptr.vmem [resolvable:$true] %s25
      %31 = dma.hbm_to_vmem [thread:$0]  %s3, 1024, %s26, [#allocation3], 64, 64, 4
    $region17: #{dqn_forward.1} parent=1 // pred_fallthru
      _
    // Predicated region
    $region18: #{dqn_forward.1} parent=1 // pred_check
      _
    $region19: #{dqn_forward.1} parent=1 // pred_check_branch
      %33 = sbr.rel (0) target = $region21
    $region20: #{dqn_forward.1} parent=1 // pred_region
      _
    $region21: #{dqn_forward.1} parent=1 // pred_fallthru
      _
    // Predicated region
    $region22: #{dqn_forward.1} parent=1 // pred_check
      _
    $region23: #{dqn_forward.1} parent=1 // pred_check_branch
      %35 = sbr.rel (0) target = $region25
    $region24: #{dqn_forward.1} parent=1 // pred_region
      %s37 = ssub.s32 1024, 1024
      %38 = vsyncadd [#allocation5], %s37
      %s39 = sshll.u32 [#allocation4], 4
      %s40 = int_to_ptr.vmem [resolvable:$true] %s39
      %45 = dma.hbm_to_vmem [thread:$0]  %s5, 1024, %s40, [#allocation5], 64, 64, 4
    $region25: #{dqn_forward.1} parent=1 // pred_fallthru
      _
    // Predicated region
    $region26: #{dqn_forward.1} parent=1 // pred_check
      _
    $region27: #{dqn_forward.1} parent=1 // pred_check_branch
      %47 = sbr.rel (0) target = $region29
    $region28: #{dqn_forward.1} parent=1 // pred_region
      _
    $region29: #{dqn_forward.1} parent=1 // pred_fallthru
      _
    // Predicated region
    $region30: #{dqn_forward.1} parent=1 // pred_check
      _
    $region31: #{dqn_forward.1} parent=1 // pred_check_branch
      %49 = sbr.rel (0) target = $region33
    $region32: #{dqn_forward.1} parent=1 // pred_region
      %50 = dma.done [#allocation3], 1024
    $region33: #{dqn_forward.1} parent=1 // pred_fallthru
      _
    // Predicated region
    $region34: #{dqn_forward.1} parent=1 // pred_check
      _
    $region35: #{dqn_forward.1} parent=1 // pred_check_branch
      %52 = sbr.rel (0) target = $region37
    $region36: #{dqn_forward.1} parent=1 // pred_region
      %53 = dma.done [#allocation5], 1024
    $region37: #{dqn_forward.1} parent=1 // pred_fallthru
      _
    %v55 = vld [vmem:[%s0] sm:$0xf]
    %v56 = vld [vmem:[%s0 + $0x4] sm:$0xf]
    %v57 = vld [vmem:[%s1] sm:$0xf]
    %v58 = vld [vmem:[%s1 + $0x4] sm:$0xf]
    %v59 = vld [vmem:[%s2] sm:$0x1]
    %v61 = vlaneseq
    %v62 = vshrl.u32 %v61, 7
    %v63 = vsub.s32 0, %v62
    %v64 = vrot.slane %v59, %v63
    %v68 = vunpack.c.l.b16 %v55
    %v69 = vunpack.c.l.b16 %v56
    %v70 = vpack.c.b16 %v69, %v68
    %v73 = vunpack.c.l.b16 %v57
    %v74 = vunpack.c.l.b16 %v58
    %v75 = vpack.c.b16 %v74, %v73
    %vm77 = vcmask 130048
    %v79 = vsel %vm77, %v70, 0
    %81 = vmatprep.subr.bf16.mxu0 0
    %82 = vmatpush1.bf16.msra.mxu0 %v75
    %83 = vmatprep.subr.bf16.mxu0 0
    %84 = vmatpush1.bf16.msra.mxu0 0
    %85 = vmatprep.subr.bf16.mxu0 0
    %86 = vmatpush1.bf16.msra.mxu0 0
    %87 = vmatprep.subr.bf16.mxu0 0
    %88 = vmatpush1.bf16.msra.mxu0 0
    %89 = vmatprep.subr.bf16.mxu0 0
    %90 = vmatpush1.bf16.msra.mxu0 0
    %91 = vmatprep.subr.bf16.mxu0 0
    %92 = vmatpush1.bf16.msra.mxu0 0
    %93 = vmatprep.subr.bf16.mxu0 0
    %94 = vmatpush1.bf16.msra.mxu0 0
    %95 = vmatprep.subr.bf16.mxu0 0
    %96 = vmatpush1.bf16.msra.mxu0 0
    %97 = vmatprep.subr.bf16.mxu0 0
    %98 = vmatpush1.bf16.msra.mxu0 0
    %99 = vmatprep.subr.bf16.mxu0 0
    %100 = vmatpush1.bf16.msra.mxu0 0
    %101 = vmatprep.subr.bf16.mxu0 0
    %102 = vmatpush1.bf16.msra.mxu0 0
    %103 = vmatprep.subr.bf16.mxu0 0
    %104 = vmatpush1.bf16.msra.mxu0 0
    %105 = vmatprep.subr.bf16.mxu0 0
    %106 = vmatpush1.bf16.msra.mxu0 0
    %107 = vmatprep.subr.bf16.mxu0 0
    %108 = vmatpush1.bf16.msra.mxu0 0
    %109 = vmatprep.subr.bf16.mxu0 0
    %110 = vmatpush1.bf16.msra.mxu0 0
    %111 = vmatprep.subr.bf16.mxu0 0
    %112 = vmatpush1.bf16.msra.mxu0 0
    %113 = vmatprep.mubr.bf16.mxu0 0
    %114 = vmatmul.mubr.bf16.gmra.mrb[0].mxu0 %v79
    %v115 = vpop.f32.mrb[0].mxu0
    %v116 = vadd.f32 %v64, %v115
    %v117 = vpop.f32.mrb[0].mxu0
    %v118 = vpop.f32.mrb[0].mxu0
    %v119 = vadd.f32 %v64, %v118
    %v120 = vpop.f32.mrb[0].mxu0
    %121 = vdwg.mxu0
    %v122 = vmax.f32 %v116, 0.0
    %v123 = vmax.f32 %v119, 0.0
    %v124 = vpack.c.bf16 %v123, %v122
    %v125 = vld [vmem:[#allocation2] sm:$0xf]
    %v126 = vld [vmem:[#allocation2 + $0x4] sm:$0xf]
    %v127 = vld [vmem:[#allocation2 + $0x8] sm:$0xf]
    %v128 = vld [vmem:[#allocation2 + $0xc] sm:$0xf]
    %v129 = vld [vmem:[#allocation2 + $0x10] sm:$0xf]
    %v130 = vld [vmem:[#allocation2 + $0x14] sm:$0xf]
    %v131 = vld [vmem:[#allocation2 + $0x18] sm:$0xf]
    %v132 = vld [vmem:[#allocation2 + $0x1c] sm:$0xf]
    %v133 = vld [vmem:[#allocation2 + $0x20] sm:$0xf]
    %v134 = vld [vmem:[#allocation2 + $0x24] sm:$0xf]
    %v135 = vld [vmem:[#allocation2 + $0x28] sm:$0xf]
    %v136 = vld [vmem:[#allocation2 + $0x2c] sm:$0xf]
    %v137 = vld [vmem:[#allocation2 + $0x30] sm:$0xf]
    %v138 = vld [vmem:[#allocation2 + $0x34] sm:$0xf]
    %v139 = vld [vmem:[#allocation2 + $0x38] sm:$0xf]
    %v140 = vld [vmem:[#allocation2 + $0x3c] sm:$0xf]
    %v141 = vld [vmem:[%s4] sm:$0x1]
    %v143 = vlaneseq
    %v144 = vshrl.u32 %v143, 7
    %v145 = vsub.s32 0, %v144
    %v146 = vrot.slane %v141, %v145
    %v164 = vunpack.c.l.b16 %v125
    %v165 = vunpack.c.l.b16 %v126
    %v166 = vunpack.c.l.b16 %v127
    %v167 = vunpack.c.l.b16 %v128
    %v168 = vunpack.c.l.b16 %v129
    %v169 = vunpack.c.l.b16 %v130
    %v170 = vunpack.c.l.b16 %v131
    %v171 = vunpack.c.l.b16 %v132
    %v172 = vunpack.c.l.b16 %v133
    %v173 = vunpack.c.l.b16 %v134
    %v174 = vunpack.c.l.b16 %v135
    %v175 = vunpack.c.l.b16 %v136
    %v176 = vunpack.c.l.b16 %v137
    %v177 = vunpack.c.l.b16 %v138
    %v178 = vunpack.c.l.b16 %v139
    %v179 = vunpack.c.l.b16 %v140
    %v180 = vpack.c.b16 %v165, %v164
    %v181 = vpack.c.b16 %v167, %v166
    %v182 = vpack.c.b16 %v169, %v168
    %v183 = vpack.c.b16 %v171, %v170
    %v184 = vpack.c.b16 %v173, %v172
    %v185 = vpack.c.b16 %v175, %v174
    %v186 = vpack.c.b16 %v177, %v176
    %v187 = vpack.c.b16 %v179, %v178
    %196 = vmatprep.subr.bf16.mxu0 0
    %197 = vmatpush1.bf16.msra.mxu0 %v180
    %198 = vmatprep.subr.bf16.mxu0 0
    %199 = vmatpush1.bf16.msra.mxu0 %v181
    %200 = vmatprep.subr.bf16.mxu0 0
    %201 = vmatpush1.bf16.msra.mxu0 %v182
    %202 = vmatprep.subr.bf16.mxu0 0
    %203 = vmatpush1.bf16.msra.mxu0 %v183
    %204 = vmatprep.subr.bf16.mxu0 0
    %205 = vmatpush1.bf16.msra.mxu0 %v184
    %206 = vmatprep.subr.bf16.mxu0 0
    %207 = vmatpush1.bf16.msra.mxu0 %v185
    %208 = vmatprep.subr.bf16.mxu0 0
    %209 = vmatpush1.bf16.msra.mxu0 %v186
    %210 = vmatprep.subr.bf16.mxu0 0
    %211 = vmatpush1.bf16.msra.mxu0 %v187
    %212 = vmatprep.subr.bf16.mxu0 0
    %213 = vmatpush1.bf16.msra.mxu0 0
    %214 = vmatprep.subr.bf16.mxu0 0
    %215 = vmatpush1.bf16.msra.mxu0 0
    %216 = vmatprep.subr.bf16.mxu0 0
    %217 = vmatpush1.bf16.msra.mxu0 0
    %218 = vmatprep.subr.bf16.mxu0 0
    %219 = vmatpush1.bf16.msra.mxu0 0
    %220 = vmatprep.subr.bf16.mxu0 0
    %221 = vmatpush1.bf16.msra.mxu0 0
    %222 = vmatprep.subr.bf16.mxu0 0
    %223 = vmatpush1.bf16.msra.mxu0 0
    %224 = vmatprep.subr.bf16.mxu0 0
    %225 = vmatpush1.bf16.msra.mxu0 0
    %226 = vmatprep.subr.bf16.mxu0 0
    %227 = vmatpush1.bf16.msra.mxu0 0
    %228 = vmatprep.mubr.bf16.mxu0 0
    %229 = vmatmul.mubr.bf16.gmra.mrb[0].mxu0 %v124
    %v230 = vpop.f32.mrb[0].mxu0
    %v231 = vadd.f32 %v146, %v230
    %v232 = vpop.f32.mrb[0].mxu0
    %v233 = vpop.f32.mrb[0].mxu0
    %v234 = vadd.f32 %v146, %v233
    %v235 = vpop.f32.mrb[0].mxu0
    %236 = vdwg.mxu0
    %v237 = vmax.f32 %v231, 0.0
    %v238 = vmax.f32 %v234, 0.0
    %v239 = vpack.c.bf16 %v238, %v237
    %v240 = vld [vmem:[#allocation4] sm:$0xf]
    %v241 = vld [vmem:[#allocation4 + $0x4] sm:$0xf]
    %v242 = vld [vmem:[#allocation4 + $0x8] sm:$0xf]
    %v243 = vld [vmem:[#allocation4 + $0xc] sm:$0xf]
    %v244 = vld [vmem:[#allocation4 + $0x10] sm:$0xf]
    %v245 = vld [vmem:[#allocation4 + $0x14] sm:$0xf]
    %v246 = vld [vmem:[#allocation4 + $0x18] sm:$0xf]
    %v247 = vld [vmem:[#allocation4 + $0x1c] sm:$0xf]
    %v248 = vld [vmem:[#allocation4 + $0x20] sm:$0xf]
    %v249 = vld [vmem:[#allocation4 + $0x24] sm:$0xf]
    %v250 = vld [vmem:[#allocation4 + $0x28] sm:$0xf]
    %v251 = vld [vmem:[#allocation4 + $0x2c] sm:$0xf]
    %v252 = vld [vmem:[#allocation4 + $0x30] sm:$0xf]
    %v253 = vld [vmem:[#allocation4 + $0x34] sm:$0xf]
    %v254 = vld [vmem:[#allocation4 + $0x38] sm:$0xf]
    %v255 = vld [vmem:[#allocation4 + $0x3c] sm:$0xf]
    %v256 = vld [vmem:[%s6] sm:$0x1]
    %v258 = vlaneseq
    %v259 = vshrl.u32 %v258, 7
    %v260 = vsub.s32 0, %v259
    %v261 = vrot.slane %v256, %v260
    %v279 = vunpack.c.l.b16 %v240
    %v280 = vunpack.c.l.b16 %v241
    %v281 = vunpack.c.l.b16 %v242
    %v282 = vunpack.c.l.b16 %v243
    %v283 = vunpack.c.l.b16 %v244
    %v284 = vunpack.c.l.b16 %v245
    %v285 = vunpack.c.l.b16 %v246
    %v286 = vunpack.c.l.b16 %v247
    %v287 = vunpack.c.l.b16 %v248
    %v288 = vunpack.c.l.b16 %v249
    %v289 = vunpack.c.l.b16 %v250
    %v290 = vunpack.c.l.b16 %v251
    %v291 = vunpack.c.l.b16 %v252
    %v292 = vunpack.c.l.b16 %v253
    %v293 = vunpack.c.l.b16 %v254
    %v294 = vunpack.c.l.b16 %v255
    %v295 = vpack.c.b16 %v280, %v279
    %v296 = vpack.c.b16 %v282, %v281
    %v297 = vpack.c.b16 %v284, %v283
    %v298 = vpack.c.b16 %v286, %v285
    %v299 = vpack.c.b16 %v288, %v287
    %v300 = vpack.c.b16 %v290, %v289
    %v301 = vpack.c.b16 %v292, %v291
    %v302 = vpack.c.b16 %v294, %v293
    %311 = vmatprep.subr.bf16.mxu0 0
    %312 = vmatpush1.bf16.msra.mxu0 %v295
    %313 = vmatprep.subr.bf16.mxu0 0
    %314 = vmatpush1.bf16.msra.mxu0 %v296
    %315 = vmatprep.subr.bf16.mxu0 0
    %316 = vmatpush1.bf16.msra.mxu0 %v297
    %317 = vmatprep.subr.bf16.mxu0 0
    %318 = vmatpush1.bf16.msra.mxu0 %v298
    %319 = vmatprep.subr.bf16.mxu0 0
    %320 = vmatpush1.bf16.msra.mxu0 %v299
    %321 = vmatprep.subr.bf16.mxu0 0
    %322 = vmatpush1.bf16.msra.mxu0 %v300
    %323 = vmatprep.subr.bf16.mxu0 0
    %324 = vmatpush1.bf16.msra.mxu0 %v301
    %325 = vmatprep.subr.bf16.mxu0 0
    %326 = vmatpush1.bf16.msra.mxu0 %v302
    %327 = vmatprep.subr.bf16.mxu0 0
    %328 = vmatpush1.bf16.msra.mxu0 0
    %329 = vmatprep.subr.bf16.mxu0 0
    %330 = vmatpush1.bf16.msra.mxu0 0
    %331 = vmatprep.subr.bf16.mxu0 0
    %332 = vmatpush1.bf16.msra.mxu0 0
    %333 = vmatprep.subr.bf16.mxu0 0
    %334 = vmatpush1.bf16.msra.mxu0 0
    %335 = vmatprep.subr.bf16.mxu0 0
    %336 = vmatpush1.bf16.msra.mxu0 0
    %337 = vmatprep.subr.bf16.mxu0 0
    %338 = vmatpush1.bf16.msra.mxu0 0
    %339 = vmatprep.subr.bf16.mxu0 0
    %340 = vmatpush1.bf16.msra.mxu0 0
    %341 = vmatprep.subr.bf16.mxu0 0
    %342 = vmatpush1.bf16.msra.mxu0 0
    %343 = vmatprep.mubr.bf16.mxu0 0
    %344 = vmatmul.mubr.bf16.gmra.mrb[0].mxu0 %v239
    %v345 = vpop.f32.mrb[0].mxu0
    %v346 = vadd.f32 %v261, %v345
    %v347 = vpop.f32.mrb[0].mxu0
    %v348 = vpop.f32.mrb[0].mxu0
    %v349 = vadd.f32 %v261, %v348
    %v350 = vpop.f32.mrb[0].mxu0
    %351 = vdwg.mxu0
    %352 = vst [vmem:[%s7] sm:$0xff] %v346
    %353 = vst [vmem:[%s7 + $0x8] sm:$0xff] %v349
    // Predicated region
    $region38: #{dqn_forward.1} parent=1 // pred_check
      _
    $region39: #{dqn_forward.1} parent=1 // pred_check_branch
      %355 = sbr.rel (0) target = $region41
    $region40: #{dqn_forward.1} parent=1 // pred_region
      _
    $region41: #{dqn_forward.1} parent=1 // pred_fallthru
      _
    // Predicated region
    $region42: #{dqn_forward.1} parent=1 // pred_check
      _
    $region43: #{dqn_forward.1} parent=1 // pred_check_branch
      %357 = sbr.rel (0) target = $region45
    $region44: #{dqn_forward.1} parent=1 // pred_region
      _
    $region45: #{dqn_forward.1} parent=1 // pred_fallthru
      _
    %358 = vsyncpa [#allocation3], 1
    %359 = vsyncpa [#allocation5], 1

</llo_original>
